<compile_context>
chip_gen: v5e
topology: v5e:2x2
jax: 0.10.0
libtpu: 0.0.40
codegen_flags: <defaults>
</compile_context>

<pallas_src>
import functools

import jax
import jax.numpy as jnp
from jax.experimental import pallas as pl
from jax.experimental.pallas import tpu as pltpu

_LANE = 128
_MAX_BLOCK_ROWS = 1024  # (1024, 128) f32 tile = 512 KiB per input per buffer


def _round_up(x, m):
    return (x + m - 1) // m * m


def _vae_loss_kernel(xhat_ref, y_ref, zmean_ref, zlogvar_ref,
                     xent_ref, kl_ref, acc_ref, *, inv_n):
    i = pl.program_id(0)

    @pl.when(i == 0)
    def _():
        acc_ref[...] = jnp.zeros_like(acc_ref)

    # Cast to f32 in-kernel (inputs are streamed in native dtype).
    xh = xhat_ref[...].astype(jnp.float32)
    yy = y_ref[...].astype(jnp.float32)

    # PyTorch's binary_cross_entropy clamps log terms at -100.
    log_xh = jnp.maximum(jnp.log(xh), -100.0)
    log_1m = jnp.maximum(jnp.log(1.0 - xh), -100.0)
    bce = -(yy * log_xh + (1.0 - yy) * log_1m)

    # Per-lane partial sums; cross-lane reduce deferred to the finalize step.
    acc_ref[...] += jnp.sum(bce, axis=0, keepdims=True)

    @pl.when(i == pl.num_programs(0) - 1)
    def _():
        xent_ref[0, 0] = jnp.sum(acc_ref[...]) * inv_n  # reduction='mean'
        zm = zmean_ref[...].astype(jnp.float32)
        zl = zlogvar_ref[...].astype(jnp.float32)
        kl_ref[0, 0] = -0.5 * jnp.sum(1.0 + zl - zm * zm - jnp.exp(zl))


def vae_loss(x_hat, y, z_mean, z_logvar):
    """Pallas implementation of VaeLoss.forward. Returns (xent_loss, kl_loss)."""
    n = int(x_hat.size)
    assert int(y.size) == n

    # Lane-dense layout: (rows, 128), rows padded to the tile size.
    rows = _round_up(n, _LANE) // _LANE
    if rows >= _MAX_BLOCK_ROWS:
        block_rows = _MAX_BLOCK_ROWS
        rows_p = _round_up(rows, block_rows)
    else:
        rows_p = _round_up(rows, 8)
        block_rows = rows_p
    total = rows_p * _LANE
    num_blocks = rows_p // block_rows

    def to_slab(a):
        flat = a.reshape(-1)
        if total != n:
            # Pad with 1.0 (both tensors): gives an exactly-zero BCE term.
            flat = jnp.pad(flat, (0, total - n), constant_values=1.0)
        return flat.reshape(rows_p, _LANE)

    xh2 = to_slab(x_hat)
    y2 = to_slab(y)

    zm2 = z_mean.reshape(-1, z_mean.shape[-1])
    zl2 = z_logvar.reshape(-1, z_logvar.shape[-1])
    zrows, zcols = zm2.shape
    zc = int(z_mean.size)

    kernel = functools.partial(_vae_loss_kernel, inv_n=1.0 / float(n))

    cost = pl.CostEstimate(
        flops=6 * n + 6 * zc,
        transcendentals=2 * n + zc,  # 2 logs per BCE element + 1 exp per latent
        bytes_accessed=(n * x_hat.dtype.itemsize + n * y.dtype.itemsize
                        + zc * z_mean.dtype.itemsize
                        + zc * z_logvar.dtype.itemsize + 8),
    )

    xent, kl = pl.pallas_call(
        kernel,
        out_shape=(
            jax.ShapeDtypeStruct((1, 1), jnp.float32),
            jax.ShapeDtypeStruct((1, 1), jnp.float32),
        ),
        grid_spec=pltpu.PrefetchScalarGridSpec(
            num_scalar_prefetch=0,
            grid=(num_blocks,),
            in_specs=[
                pl.BlockSpec((block_rows, _LANE), lambda i: (i, 0)),
                pl.BlockSpec((block_rows, _LANE), lambda i: (i, 0)),
                pl.BlockSpec((zrows, zcols), lambda i: (0, 0)),
                pl.BlockSpec((zrows, zcols), lambda i: (0, 0)),
            ],
            out_specs=(
                pl.BlockSpec((1, 1), lambda i: (0, 0),
                             memory_space=pltpu.MemorySpace.SMEM),
                pl.BlockSpec((1, 1), lambda i: (0, 0),
                             memory_space=pltpu.MemorySpace.SMEM),
            ),
            scratch_shapes=[pltpu.VMEM((1, _LANE), jnp.float32)],
        ),
        compiler_params=pltpu.CompilerParams(
            dimension_semantics=("arbitrary",),  # row axis carries the reduction
        ),
        cost_estimate=cost,
    )(xh2, y2, zm2, zl2)
    # TODO(synk): for v7x at scale, split the row grid into two partial sums so
    # both TensorCores participate; single-TC is fine at these sizes.
    return xent[0, 0], kl[0, 0]


def _reference(x_hat, y, z_mean, z_logvar):
    xh = x_hat.astype(jnp.float32)
    yy = y.astype(jnp.float32)
    log_xh = jnp.maximum(jnp.log(xh), -100.0)
    log_1m = jnp.maximum(jnp.log(1.0 - xh), -100.0)
    xent = jnp.mean(-(yy * log_xh + (1.0 - yy) * log_1m))
    zm = z_mean.astype(jnp.float32)
    zl = z_logvar.astype(jnp.float32)
    kl = -0.5 * jnp.sum(1.0 + zl - zm * zm - jnp.exp(zl))
    return xent, kl


if __name__ == "__main__":
    key = jax.random.PRNGKey(0)
    k1, k2, k3, k4 = jax.random.split(key, 4)

    batch, seq, vocab, latent = 2, 8, 32, 16

    # x_hat: probabilities in (0, 1); y: {0, 1} targets.
    x_hat = jax.nn.sigmoid(jax.random.normal(k1, (batch, seq, vocab), jnp.float32))
    y = (jax.random.uniform(k2, (batch, seq, vocab)) > 0.5).astype(jnp.float32)
    z_mean = jax.random.normal(k3, (batch, latent), jnp.float32)
    z_logvar = 0.1 * jax.random.normal(k4, (batch, latent), jnp.float32)

    xent, kl = jax.block_until_ready(vae_loss(x_hat, y, z_mean, z_logvar))

    xent_ref, kl_ref = _reference(x_hat, y, z_mean, z_logvar)
    assert jnp.allclose(xent, xent_ref, rtol=1e-5, atol=1e-5), (xent, xent_ref)
    assert jnp.allclose(kl, kl_ref, rtol=1e-5, atol=1e-5), (kl, kl_ref)

    print("KERNEL_OK")
</pallas_src>

<mosaic_0001>
module attributes {stable_mosaic.version = 11 : i64} {
  func.func @_vae_loss_kernel(%arg0: i32, %arg1: memref<8x128xf32, #tpu.memory_space<vmem>>, %arg2: memref<8x128xf32, #tpu.memory_space<vmem>>, %arg3: memref<2x16xf32, #tpu.memory_space<vmem>>, %arg4: memref<2x16xf32, #tpu.memory_space<vmem>>, %arg5: memref<1x1xf32, #tpu.memory_space<smem>>, %arg6: memref<1x1xf32, #tpu.memory_space<smem>>, %arg7: memref<1x128xf32, #tpu.memory_space<vmem>>) attributes {dimension_semantics = [#tpu.dimension_semantics<arbitrary>], iteration_bounds = array<i64: 1>, scalar_prefetch = 0 : i64, scratch_operands = 1 : i64, tpu.core_type = #tpu.core_type<tc>, window_params = [{transform_indices = @transform_0, window_bounds = array<i64: 8, 128>}, {transform_indices = @transform_1, window_bounds = array<i64: 8, 128>}, {pipeline_mode = #tpu.pipeline_mode<synchronous>, transform_indices = @transform_2, window_bounds = array<i64: 2, 16>}, {pipeline_mode = #tpu.pipeline_mode<synchronous>, transform_indices = @transform_3, window_bounds = array<i64: 2, 16>}, {transform_indices = @transform_4, window_bounds = array<i64: 1, 1>}, {transform_indices = @transform_5, window_bounds = array<i64: 1, 1>}]} {
    %c0_i32 = arith.constant 0 : i32
    %0 = arith.cmpi eq, %arg0, %c0_i32 : i32
    %1 = arith.extui %0 : i1 to i32
    %c0_i32_0 = arith.constant 0 : i32
    %2 = arith.cmpi ne, %1, %c0_i32_0 : i32
    scf.if %2 {
      %cst_15 = arith.constant 0.000000e+00 : f32
      %28 = vector.broadcast %cst_15 : f32 to vector<1x128xf32>
      %c0_16 = arith.constant 0 : index
      %c0_17 = arith.constant 0 : index
      %29 = vector.load %arg7[%c0_16, %c0_17] : memref<1x128xf32, #tpu.memory_space<vmem>>, vector<1x128xf32>
      tpu.vector_store %arg7[%c0_16, %c0_17], %28 {strides = array<i32>} : memref<1x128xf32, #tpu.memory_space<vmem>>, vector<1x128xf32>,
    } else {
    }
    %c0 = arith.constant 0 : index
    %c0_1 = arith.constant 0 : index
    %3 = vector.load %arg1[%c0, %c0_1] : memref<8x128xf32, #tpu.memory_space<vmem>>, vector<8x128xf32>
    %c0_2 = arith.constant 0 : index
    %c0_3 = arith.constant 0 : index
    %4 = vector.load %arg2[%c0_2, %c0_3] : memref<8x128xf32, #tpu.memory_space<vmem>>, vector<8x128xf32>
    %5 = math.log %3 : vector<8x128xf32>
    %cst = arith.constant -1.000000e+02 : f32
    %6 = vector.broadcast %cst : f32 to vector<8x128xf32>
    %7 = arith.maximumf %5, %6 : vector<8x128xf32>
    %cst_4 = arith.constant 1.000000e+00 : f32
    %8 = vector.broadcast %cst_4 : f32 to vector<8x128xf32>
    %9 = arith.subf %8, %3 : vector<8x128xf32>
    %10 = math.log %9 : vector<8x128xf32>
    %cst_5 = arith.constant -1.000000e+02 : f32
    %11 = vector.broadcast %cst_5 : f32 to vector<8x128xf32>
    %12 = arith.maximumf %10, %11 : vector<8x128xf32>
    %13 = arith.mulf %4, %7 : vector<8x128xf32>
    %cst_6 = arith.constant 1.000000e+00 : f32
    %14 = vector.broadcast %cst_6 : f32 to vector<8x128xf32>
    %15 = arith.subf %14, %4 : vector<8x128xf32>
    %16 = arith.mulf %15, %12 : vector<8x128xf32>
    %17 = arith.addf %13, %16 : vector<8x128xf32>
    %cst_7 = arith.constant 0.000000e+00 : f32
    %18 = vector.broadcast %cst_7 : f32 to vector<8x128xf32>
    %19 = arith.subf %18, %17 : vector<8x128xf32>
    %c0_8 = arith.constant 0 : index
    %c0_9 = arith.constant 0 : index
    %20 = vector.load %arg7[%c0_8, %c0_9] : memref<1x128xf32, #tpu.memory_space<vmem>>, vector<1x128xf32>
    %cst_10 = arith.constant dense<0.000000e+00> : vector<128xf32>
    %21 = vector.multi_reduction <add>, %19, %cst_10 [0] : vector<8x128xf32> to vector<128xf32>
    %22 = vector.shape_cast %21 : vector<128xf32> to vector<1x128xf32>
    %23 = arith.addf %20, %22 : vector<1x128xf32>
    %c0_11 = arith.constant 0 : index
    %c0_12 = arith.constant 0 : index
    %24 = vector.load %arg7[%c0_11, %c0_12] : memref<1x128xf32, #tpu.memory_space<vmem>>, vector<1x128xf32>
    tpu.vector_store %arg7[%c0_11, %c0_12], %23 {strides = array<i32>} : memref<1x128xf32, #tpu.memory_space<vmem>>, vector<1x128xf32>,
    %c0_i32_13 = arith.constant 0 : i32
    %25 = arith.cmpi eq, %arg0, %c0_i32_13 : i32
    %26 = arith.extui %25 : i1 to i32
    %c0_i32_14 = arith.constant 0 : i32
    %27 = arith.cmpi ne, %26, %c0_i32_14 : i32
    scf.if %27 {
      %c0_15 = arith.constant 0 : index
      %c0_16 = arith.constant 0 : index
      %28 = vector.load %arg7[%c0_15, %c0_16] : memref<1x128xf32, #tpu.memory_space<vmem>>, vector<1x128xf32>
      %29 = vector.shape_cast %28 : vector<1x128xf32> to vector<1x1x128xf32>
      %cst_17 = arith.constant dense<0.000000e+00> : vector<1xf32>
      %30 = vector.multi_reduction <add>, %29, %cst_17 [1, 2] : vector<1x1x128xf32> to vector<1xf32>
      %31 = vector.shape_cast %30 : vector<1xf32> to vector<1x1x1xf32>
      %32 = vector.extract %31[0, 0, 0] : f32 from vector<1x1x1xf32>
      %cst_18 = arith.constant 0.001953125 : f32
      %33 = arith.mulf %32, %cst_18 : f32
      %c0_19 = arith.constant 0 : index
      %c0_20 = arith.constant 0 : index
      %34 = memref.load %arg5[%c0_19, %c0_20] : memref<1x1xf32, #tpu.memory_space<smem>>
      memref.store %33, %arg5[%c0_19, %c0_20] : memref<1x1xf32, #tpu.memory_space<smem>>
      %c0_21 = arith.constant 0 : index
      %c0_22 = arith.constant 0 : index
      %35 = vector.load %arg3[%c0_21, %c0_22] : memref<2x16xf32, #tpu.memory_space<vmem>>, vector<2x16xf32>
      %c0_23 = arith.constant 0 : index
      %c0_24 = arith.constant 0 : index
      %36 = vector.load %arg4[%c0_23, %c0_24] : memref<2x16xf32, #tpu.memory_space<vmem>>, vector<2x16xf32>
      %cst_25 = arith.constant 1.000000e+00 : f32
      %37 = vector.broadcast %cst_25 : f32 to vector<2x16xf32>
      %38 = arith.addf %37, %36 : vector<2x16xf32>
      %39 = arith.mulf %35, %35 : vector<2x16xf32>
      %40 = arith.subf %38, %39 : vector<2x16xf32>
      %41 = math.exp %36 : vector<2x16xf32>
      %42 = arith.subf %40, %41 : vector<2x16xf32>
      %43 = vector.shape_cast %42 : vector<2x16xf32> to vector<1x2x16xf32>
      %cst_26 = arith.constant dense<0.000000e+00> : vector<1xf32>
      %44 = vector.multi_reduction <add>, %43, %cst_26 [1, 2] : vector<1x2x16xf32> to vector<1xf32>
      %45 = vector.shape_cast %44 : vector<1xf32> to vector<1x1x1xf32>
      %46 = vector.extract %45[0, 0, 0] : f32 from vector<1x1x1xf32>
      %cst_27 = arith.constant -5.000000e-01 : f32
      %47 = arith.mulf %cst_27, %46 : f32
      %c0_28 = arith.constant 0 : index
      %c0_29 = arith.constant 0 : index
      %48 = memref.load %arg6[%c0_28, %c0_29] : memref<1x1xf32, #tpu.memory_space<smem>>
      memref.store %47, %arg6[%c0_28, %c0_29] : memref<1x1xf32, #tpu.memory_space<smem>>
    } else {
    }
    return
  }
  func.func @transform_0(%arg0: i32) -> (i32, i32) {
    %c0_i32 = arith.constant 0 : i32
    %c0_i32_0 = arith.constant 0 : i32
    return %arg0, %c0_i32 : i32, i32
  }
  func.func @transform_1(%arg0: i32) -> (i32, i32) {
    %c0_i32 = arith.constant 0 : i32
    %c0_i32_0 = arith.constant 0 : i32
    return %arg0, %c0_i32 : i32, i32
  }
  func.func @transform_2(%arg0: i32) -> (i32, i32) {
    %c0_i32 = arith.constant 0 : i32
    %c0_i32_0 = arith.constant 0 : i32
    %c0_i32_1 = arith.constant 0 : i32
    return %c0_i32, %c0_i32_0 : i32, i32
  }
  func.func @transform_3(%arg0: i32) -> (i32, i32) {
    %c0_i32 = arith.constant 0 : i32
    %c0_i32_0 = arith.constant 0 : i32
    %c0_i32_1 = arith.constant 0 : i32
    return %c0_i32, %c0_i32_0 : i32, i32
  }
  func.func @transform_4(%arg0: i32) -> (i32, i32) {
    %c0_i32 = arith.constant 0 : i32
    %c0_i32_0 = arith.constant 0 : i32
    %c0_i32_1 = arith.constant 0 : i32
    return %c0_i32, %c0_i32_0 : i32, i32
  }
  func.func @transform_5(%arg0: i32) -> (i32, i32) {
    %c0_i32 = arith.constant 0 : i32
    %c0_i32_0 = arith.constant 0 : i32
    %c0_i32_1 = arith.constant 0 : i32
    return %c0_i32, %c0_i32_0 : i32, i32
  }
}

</mosaic_0001>

<llo_original>
// kernel: tpu_custom_call.1
$region0: #{tpu_custom_call.1}
  #allocation0 [shape = 'u32[]', space=smem, size = 0x4, offset = 0x4, fixed_abs, tag = 'smem constant byte address 0x4 - core index']
  #allocation1 [shape = 'u32[72,128]{1,0:T(1,128)}', space=vmem, size = 0x9000, scoped, tag = 'internal scratch']
  #allocation2 [shape = 'f32[1,128]{1,0:T(1,128)}', space=vmem, size = 0x200, scoped, tag = 'scratch operand']
  %s0 = inlined_call_operand.hbm [shape: f32[8,128], index: 0, kind: input, shape index: {}]
  %s1 = inlined_call_operand.hbm [shape: f32[8,128], index: 1, kind: input, shape index: {}]
  %s2 = inlined_call_operand.hbm [shape: f32[2,16], index: 2, kind: input, shape index: {}]
  %s3 = inlined_call_operand.vmem [shape: f32[2,16], index: 3, kind: input, shape index: {}]
  %s4 = inlined_call_operand.hbm [shape: f32[1,1], index: 4, kind: output, shape index: {0}]
  %s5 = inlined_call_operand.hbm [shape: f32[1,1], index: 5, kind: output, shape index: {1}]
  %6 = xla_tuple %s4, %s5
  %s7 = sld [smem:[#allocation0]]
  $region54: #{tpu_custom_call.1} parent=0
    _
  %s9 = ssub.s32 1, %s7
  %s10 = scalar_select 0, %s9, %s7
  $region1: #{tpu_custom_call.1} parent=0
    #allocation3 [shape = 'u8[4096]{0}', space=vmem, size = 0x1000, scoped, tag = 'input window, operand 0, single buffered']
    #allocation4 [shape = 's32[1]{0}', space=sflag, size = 0x4, scoped, tag = 'scoped memory for tpu_custom_call.1']
    #allocation5 [shape = 's32[1]{0}', space=sflag, size = 0x4, scoped, tag = 'scoped memory for tpu_custom_call.1']
    #allocation6 [shape = 'u8[4096]{0}', space=vmem, size = 0x1000, scoped, tag = 'input window, operand 1, single buffered']
    #allocation7 [shape = 's32[1]{0}', space=sflag, size = 0x4, scoped, tag = 'scoped memory for tpu_custom_call.1']
    #allocation8 [shape = 'u8[1024]{0}', space=vmem, size = 0x400, scoped, tag = 'input window, operand 2, single buffered']
    #allocation9 [shape = 'u8[512]{0}', space=smem, size = 0x200, scoped, tag = 'output window, operand 0, single buffered']
    #allocation10 [shape = 'u8[512]{0}', space=smem, size = 0x200, scoped, tag = 'output window, operand 1, single buffered']
    #allocation11 [shape = 's32[1]{0}', space=sflag, size = 0x4, scoped, tag = 'scoped memory for tpu_custom_call.1']
    %11 = vsyncpa [#allocation4], 0
    %12 = vsyncpa [#allocation7], 0
    %13 = vsyncpa [#allocation5], 0
    %14 = vsyncpa [#allocation11], 0
    // Predicated region
    $region2: #{tpu_custom_call.1} parent=1 // pred_check
      _
    $region3: #{tpu_custom_call.1} parent=1 // pred_check_branch
      %16 = sbr.rel (0) target = $region5
    $region4: #{tpu_custom_call.1} parent=1 // pred_region
      %18 = vsyncadd [#allocation4], 0
      %s20 = sshll.u32 %s0, 4
      %s21 = int_to_ptr.hbm [resolvable:$true] %s20
      %s22 = sshll.u32 [#allocation3], 4
      %s23 = int_to_ptr.vmem [resolvable:$true] %s22
      %25 = dma.hbm_to_vmem [thread:$0]  %s21, 128, %s23, [#allocation4]
    $region5: #{tpu_custom_call.1} parent=1 // pred_fallthru
      _
    // Predicated region
    $region6: #{tpu_custom_call.1} parent=1 // pred_check
      _
    $region7: #{tpu_custom_call.1} parent=1 // pred_check_branch
      %27 = sbr.rel (0) target = $region9
    $region8: #{tpu_custom_call.1} parent=1 // pred_region
      %29 = vsyncadd [#allocation7], 0
      %s31 = sshll.u32 %s1, 4
      %s32 = int_to_ptr.hbm [resolvable:$true] %s31
      %s33 = sshll.u32 [#allocation6], 4
      %s34 = int_to_ptr.vmem [resolvable:$true] %s33
      %36 = dma.hbm_to_vmem [thread:$0]  %s32, 128, %s34, [#allocation7]
    $region9: #{tpu_custom_call.1} parent=1 // pred_fallthru
      _
    // Predicated region
    $region10: #{tpu_custom_call.1} parent=1 // pred_check
      _
    $region11: #{tpu_custom_call.1} parent=1 // pred_check_branch
      %38 = sbr.rel (0) target = $region13
    $region12: #{tpu_custom_call.1} parent=1 // pred_region
      %40 = vsyncadd [#allocation7], 0
      %s42 = sshll.u32 %s2, 4
      %s43 = int_to_ptr.hbm [resolvable:$true] %s42
      %s44 = sshll.u32 [#allocation8], 4
      %s45 = int_to_ptr.vmem [resolvable:$true] %s44
      %47 = dma.hbm_to_vmem [thread:$0]  %s43, 32, %s45, [#allocation7]
    $region13: #{tpu_custom_call.1} parent=1 // pred_fallthru
      _
    // Predicated region
    $region14: #{tpu_custom_call.1} parent=1 // pred_check
      _
    $region15: #{tpu_custom_call.1} parent=1 // pred_check_branch
      %49 = sbr.rel (0) target = $region17
    $region16: #{tpu_custom_call.1} parent=1 // pred_region
      _
    $region17: #{tpu_custom_call.1} parent=1 // pred_fallthru
      _
    // Predicated region
    $region18: #{tpu_custom_call.1} parent=1 // pred_check
      _
    $region19: #{tpu_custom_call.1} parent=1 // pred_check_branch
      %51 = sbr.rel (0) target = $region21
    $region20: #{tpu_custom_call.1} parent=1 // pred_region
      %53 = dma.done [#allocation4], 128
    $region21: #{tpu_custom_call.1} parent=1 // pred_fallthru
      _
    // Predicated region
    $region22: #{tpu_custom_call.1} parent=1 // pred_check
      _
    $region23: #{tpu_custom_call.1} parent=1 // pred_check_branch
      %55 = sbr.rel (0) target = $region25
    $region24: #{tpu_custom_call.1} parent=1 // pred_region
      %57 = dma.done [#allocation7], 128
    $region25: #{tpu_custom_call.1} parent=1 // pred_fallthru
      _
    // Predicated region
    $region26: #{tpu_custom_call.1} parent=1 // pred_check
      _
    $region27: #{tpu_custom_call.1} parent=1 // pred_check_branch
      %59 = sbr.rel (0) target = $region29
    $region28: #{tpu_custom_call.1} parent=1 // pred_region
      %61 = dma.done [#allocation7], 32
    $region29: #{tpu_custom_call.1} parent=1 // pred_fallthru
      _
    %p62 = scmp.eq.s32.totalorder 0, 0
    // Predicated region
    $region30: #{tpu_custom_call.1} parent=1 // pred_check
      %p63 = pneg %p62
    $region31: #{tpu_custom_call.1} parent=1 // pred_check_branch
      %65 = sbr.rel (%p63) target = $region33
    $region32: #{tpu_custom_call.1} parent=1 // pred_region
      %66 = vst [vmem:[#allocation2] sm:$0x1] 0.0
    $region33: #{tpu_custom_call.1} parent=1 // pred_fallthru
      _
    %v67 = vld [vmem:[#allocation3] sm:$0xff]
    %v68 = vld [vmem:[#allocation6] sm:$0xff]
    %v69 = vlog2.pop %v67
    %v70 = vmul.f32 %v69, 0.6931472
    %v71 = vmax.f32 %v70, -100.0
    %v72 = vsub.f32 1.0, %v67
    %v73 = vlog2.pop %v72
    %v74 = vmul.f32 %v73, 0.6931472
    %v75 = vmax.f32 %v74, -100.0
    %v76 = vmul.f32 %v68, %v71
    %v77 = vsub.f32 1.0, %v68
    %v78 = vmul.f32 %v77, %v75
    %v79 = vadd.f32 %v76, %v78
    %v80 = vsub.f32 0.0, %v79
    %v81 = vld [vmem:[#allocation2] sm:$0x1]
    %v82 = vrot.slane %v80, 4
    %v83 = vadd.f32 %v80, %v82
    %v84 = vrot.slane %v83, 2
    %v85 = vadd.f32 %v83, %v84
    %v86 = vrot.slane %v85, 1
    %v87 = vadd.f32 %v85, %v86
    %v88 = vadd.f32 %v81, %v87
    %89 = vst [vmem:[#allocation2] sm:$0x1] %v88
    // Predicated region
    $region34: #{tpu_custom_call.1} parent=1 // pred_check
      %p90 = pneg %p62
    $region35: #{tpu_custom_call.1} parent=1 // pred_check_branch
      %92 = sbr.rel (%p90) target = $region37
    $region36: #{tpu_custom_call.1} parent=1 // pred_region
      %v93 = vld [vmem:[#allocation2] sm:$0x1]
      %vm94 = vcmask 1040384
      %v95 = vsel %vm94, %v93, 0.0
      %96 = vadd.xlane.f32.xlu0 %v95
      %v97 = vpop.xlane.xlu0 %96
      %v98 = vrot.slane %v97, 4
      %v99 = vadd.f32 %v97, %v98
      %v100 = vrot.slane %v99, 2
      %v101 = vadd.f32 %v99, %v100
      %v102 = vrot.slane %v101, 1
      %v103 = vadd.f32 %v101, %v102
      %s104 = vtos %v103
      %s105 = smul.f32 %s104, 0.001953125
      %s106 = scalar_lea.smem [#allocation9], 0
      %107 = sst [smem:[%s106]] %s105
      %v108 = vld [vmem:[#allocation8] sm:$0x3]
      %v109 = vld [vmem:[%s3] sm:$0x3]
      %v110 = vadd.f32 %v109, 1.0
      %v111 = vmul.f32 %v108, %v108
      %v112 = vsub.f32 %v110, %v111
      %v113 = vmul.f32 %v109, 1.442695
      %v114 = vpow.pop %v113
      %v115 = vsub.f32 %v112, %v114
      %vm116 = vcmask 123904
      %v117 = vsel %vm116, %v115, 0.0
      %118 = vadd.xlane.f32.xlu0 %v117
      %v119 = vpop.xlane.xlu0 %118
      %v120 = vrot.slane %v119, 4
      %v121 = vadd.f32 %v119, %v120
      %v122 = vrot.slane %v121, 2
      %v123 = vadd.f32 %v121, %v122
      %v124 = vrot.slane %v123, 1
      %v125 = vadd.f32 %v123, %v124
      %s126 = vtos %v125
      %s127 = smul.f32 %s126, -0.5
      %s128 = scalar_lea.smem [#allocation10], 0
      %129 = sst [smem:[%s128]] %s127
    $region37: #{tpu_custom_call.1} parent=1 // pred_fallthru
      _
    // Predicated region
    $region38: #{tpu_custom_call.1} parent=1 // pred_check
      _
    $region39: #{tpu_custom_call.1} parent=1 // pred_check_branch
      %131 = sbr.rel (0) target = $region41
    $region40: #{tpu_custom_call.1} parent=1 // pred_region
      %133 = vsyncadd [#allocation5], 0
      %s135 = sshll.u32 %s4, 4
      %s136 = int_to_ptr.hbm [resolvable:$true] %s135
      %138 = dma.smem_to_hbm [#allocation9], 16, %s136, [#allocation5]
    $region41: #{tpu_custom_call.1} parent=1 // pred_fallthru
      _
    // Predicated region
    $region42: #{tpu_custom_call.1} parent=1 // pred_check
      _
    $region43: #{tpu_custom_call.1} parent=1 // pred_check_branch
      %140 = sbr.rel (0) target = $region45
    $region44: #{tpu_custom_call.1} parent=1 // pred_region
      %142 = vsyncadd [#allocation11], 0
      %s144 = sshll.u32 %s5, 4
      %s145 = int_to_ptr.hbm [resolvable:$true] %s144
      %147 = dma.smem_to_hbm [#allocation10], 16, %s145, [#allocation11]
    $region45: #{tpu_custom_call.1} parent=1 // pred_fallthru
      _
    // Predicated region
    $region46: #{tpu_custom_call.1} parent=1 // pred_check
      _
    $region47: #{tpu_custom_call.1} parent=1 // pred_check_branch
      %149 = sbr.rel (0) target = $region49
    $region48: #{tpu_custom_call.1} parent=1 // pred_region
      %151 = dma.done [#allocation5], 16
    $region49: #{tpu_custom_call.1} parent=1 // pred_fallthru
      _
    // Predicated region
    $region50: #{tpu_custom_call.1} parent=1 // pred_check
      _
    $region51: #{tpu_custom_call.1} parent=1 // pred_check_branch
      %153 = sbr.rel (0) target = $region53
    $region52: #{tpu_custom_call.1} parent=1 // pred_region
      %155 = dma.done [#allocation11], 16
    $region53: #{tpu_custom_call.1} parent=1 // pred_fallthru
      _
    %156 = sfence
    %157 = vsyncpa [#allocation4], 1
    %158 = vsyncpa [#allocation7], 1
    %159 = vsyncpa [#allocation5], 1
    %160 = vsyncpa [#allocation11], 1

</llo_original>
